<compile_context>
chip_gen: v5e
topology: v5e:2x2
jax: 0.10.0
libtpu: 0.0.40
codegen_flags: <defaults>
</compile_context>

<pallas_src>
import math
import jax
import jax.numpy as jnp
from jax import lax
from jax.experimental import pallas as pl
from jax.experimental.pallas import tpu as pltpu

HIDDEN = 64        # hp.hidden (logical)
HIDDEN_PAD = 128   # lane-dense padded hidden width


def _round_up(n, m):
    return (n + m - 1) // m * m


# -----------------------------------------------------------------------------
# Parameter packing: one [d_pad + 160, 128] f32 slab.
#   rows [0, d_pad)              : w1 (zero-padded to [d_pad, 128])
#   rows [d_pad, d_pad+8)        : b1 in row 0
#   rows [d_pad+8, d_pad+136)    : w2 (zero-padded to [128, 128])
#   rows [d_pad+136, d_pad+144)  : b2 in row 0
#   rows [d_pad+144, d_pad+152)  : w3^T in row 0 (i.e. [1, 128])
#   rows [d_pad+152, d_pad+160)  : b3 scalar at [0, 0]
# All section starts are multiples of 8 -> sublane-aligned static slices.
# -----------------------------------------------------------------------------
def pack_params(params):
    w1, b1, w2, b2, w3, b3 = params
    d_in, h = w1.shape
    d_pad = _round_up(d_in, 8)
    hp_ = HIDDEN_PAD

    w1p = jnp.zeros((d_pad, hp_), jnp.float32).at[:d_in, :h].set(w1)
    b1p = jnp.zeros((8, hp_), jnp.float32).at[0, :h].set(b1[0])
    w2p = jnp.zeros((hp_, hp_), jnp.float32).at[:h, :h].set(w2)
    b2p = jnp.zeros((8, hp_), jnp.float32).at[0, :h].set(b2[0])
    w3p = jnp.zeros((8, hp_), jnp.float32).at[0, :h].set(w3[:, 0])
    b3p = jnp.zeros((8, hp_), jnp.float32).at[0, 0].set(b3[0, 0])

    slab = jnp.concatenate([w1p, b1p, w2p, b2p, w3p, b3p], axis=0)
    return slab, d_pad


def _make_kernel(d_pad, hp=HIDDEN_PAD):
    r_b1 = d_pad
    r_w2 = d_pad + 8
    r_b2 = r_w2 + hp
    r_w3 = r_b2 + 8
    r_b3 = r_w3 + 8

    def kernel(x_ref, slab_ref, v_ref):
        x = x_ref[...]                                 # [BM, d_pad]
        w1 = slab_ref[0:d_pad, :]                      # [d_pad, 128]
        b1 = slab_ref[r_b1:r_b1 + 1, :]                # [1, 128]
        w2 = slab_ref[r_w2:r_w2 + hp, :]               # [128, 128]
        b2 = slab_ref[r_b2:r_b2 + 1, :]                # [1, 128]
        w3 = slab_ref[r_w3:r_w3 + 1, :]                # [1, 128]
        b3 = slab_ref[r_b3:r_b3 + 1, 0:1]              # [1, 1]

        h1 = jnp.tanh(
            jnp.dot(x, w1, preferred_element_type=jnp.float32) + b1
        )                                              # [BM, 128]
        h2 = jnp.tanh(
            jnp.dot(h1, w2, preferred_element_type=jnp.float32) + b2
        )                                              # [BM, 128]

        # fc3 (output width 1): contract the lane axis of h2 against w3 on the
        # MXU (w3 @ h2^T), landing the result directly as a lane-dense [1, BM]
        # row -> unmasked full-lane stores and a dense output block.
        v_row = lax.dot_general(
            w3, h2, (((1,), (1,)), ((), ())),
            preferred_element_type=jnp.float32,
        )                                              # [1, BM]
        v_ref[...] = (v_row + b3).astype(v_ref.dtype)

    return kernel


def critic_forward(x, params, *, block_m=512):
    """x: [B, num_inputs] f32  ->  v: [B, 1] f32"""
    num_inputs = params[0].shape[0]
    B = x.shape[0]

    slab, d_pad = pack_params(params)
    n_slab_rows = d_pad + 160

    # Pad features (zeros) so the x lane dim matches the slab's w1 rows.
    if d_pad != num_inputs:
        x = jnp.pad(x, ((0, 0), (0, d_pad - num_inputs)))

    # Batch tiling.
    #  - single tile (B <= block_m): BM = round_up(B, 8); every block spans the
    #    full array extent, so any multiple of 8 is layout-legal.
    #  - multiple tiles: BM = block_m (multiple of 128) so the (1, BM) output
    #    block is lane-dense and satisfies the (8, 128) divisibility rule.
    assert block_m % 128 == 0
    if B <= block_m:
        bm = _round_up(B, 8)
    else:
        bm = block_m
    b_pad = _round_up(B, bm)
    if b_pad != B:
        x = jnp.pad(x, ((0, b_pad - B), (0, 0)))

    kernel = _make_kernel(d_pad)

    out = pl.pallas_call(
        kernel,
        out_shape=jax.ShapeDtypeStruct((1, b_pad), jnp.float32),
        grid=(b_pad // bm,),
        in_specs=[
            # streamed x tile
            pl.BlockSpec((bm, d_pad), lambda i: (i, 0)),
            # resident parameter slab (constant index map -> fetched once)
            pl.BlockSpec((n_slab_rows, HIDDEN_PAD), lambda i: (0, 0)),
        ],
        out_specs=pl.BlockSpec((1, bm), lambda i: (0, i)),
        compiler_params=pltpu.CompilerParams(
            dimension_semantics=("parallel",),
        ),
    )(x, slab)

    # (1, B_pad) -> (B_pad, 1) is a free metadata reshape; drop padded rows.
    return out.reshape(b_pad, 1)[:B]


def init_critic_params(key, num_inputs, hidden=HIDDEN):
    """Deterministic init matching torch nn.Linear defaults:
    U(-1/sqrt(fan_in), 1/sqrt(fan_in)) for weight and bias, then
    fc3.weight *= 0.1, fc3.bias *= 0.0 (as in the module)."""
    k = jax.random.split(key, 6)

    def linear(kw, kb, fan_in, fan_out):
        bound = 1.0 / math.sqrt(fan_in)
        # Stored as [in, out] (transpose of torch's [out, in]) for x @ W.
        w = jax.random.uniform(kw, (fan_in, fan_out), jnp.float32, -bound, bound)
        b = jax.random.uniform(kb, (1, fan_out), jnp.float32, -bound, bound)
        return w, b

    w1, b1 = linear(k[0], k[1], num_inputs, hidden)
    w2, b2 = linear(k[2], k[3], hidden, hidden)
    w3, b3 = linear(k[4], k[5], hidden, 1)
    w3 = w3 * 0.1
    b3 = b3 * 0.0
    return (w1, b1, w2, b2, w3, b3)


def critic_reference(x, params):
    w1, b1, w2, b2, w3, b3 = params
    h1 = jnp.tanh(x @ w1 + b1)
    h2 = jnp.tanh(h1 @ w2 + b2)
    return h2 @ w3 + b3


if __name__ == "__main__":
    key = jax.random.PRNGKey(0)
    k_param, k_x = jax.random.split(key)

    batch = 64          # hp.batch_size
    num_inputs = 11     # small MuJoCo-style observation dim (exercises padding)

    params = init_critic_params(k_param, num_inputs)
    x = jax.random.normal(k_x, (batch, num_inputs), jnp.float32)

    fwd = jax.jit(critic_forward)
    v = jax.block_until_ready(fwd(x, params))

    v_ref = critic_reference(x, params)
    assert v.shape == (batch, 1)
    assert jnp.allclose(v, v_ref, atol=1e-5, rtol=1e-5)

    print("KERNEL_OK")
</pallas_src>

<mosaic_0001>
module attributes {stable_mosaic.version = 11 : i64} {
  func.func @kernel(%arg0: i32, %arg1: memref<64x16xf32, #tpu.memory_space<vmem>>, %arg2: memref<176x128xf32, #tpu.memory_space<vmem>>, %arg3: memref<1x64xf32, #tpu.memory_space<vmem>>) attributes {dimension_semantics = [#tpu.dimension_semantics<parallel>], iteration_bounds = array<i64: 1>, scalar_prefetch = 0 : i64, scratch_operands = 0 : i64, tpu.core_type = #tpu.core_type<tc>, window_params = [{transform_indices = @transform_0, window_bounds = array<i64: 64, 16>}, {pipeline_mode = #tpu.pipeline_mode<synchronous>, transform_indices = @transform_1, window_bounds = array<i64: 176, 128>}, {transform_indices = @transform_2, window_bounds = array<i64: 1, 64>}]} {
    %c0 = arith.constant 0 : index
    %c0_0 = arith.constant 0 : index
    %0 = vector.load %arg1[%c0, %c0_0] : memref<64x16xf32, #tpu.memory_space<vmem>>, vector<64x16xf32>
    %c0_1 = arith.constant 0 : index
    %c0_2 = arith.constant 0 : index
    %1 = vector.load %arg2[%c0_1, %c0_2] : memref<176x128xf32, #tpu.memory_space<vmem>>, vector<16x128xf32>
    %c16 = arith.constant 16 : index
    %c0_3 = arith.constant 0 : index
    %2 = vector.load %arg2[%c16, %c0_3] : memref<176x128xf32, #tpu.memory_space<vmem>>, vector<1x128xf32>
    %c24 = arith.constant 24 : index
    %c0_4 = arith.constant 0 : index
    %3 = vector.load %arg2[%c24, %c0_4] : memref<176x128xf32, #tpu.memory_space<vmem>>, vector<128x128xf32>
    %c152 = arith.constant 152 : index
    %c0_5 = arith.constant 0 : index
    %4 = vector.load %arg2[%c152, %c0_5] : memref<176x128xf32, #tpu.memory_space<vmem>>, vector<1x128xf32>
    %c160 = arith.constant 160 : index
    %c0_6 = arith.constant 0 : index
    %5 = vector.load %arg2[%c160, %c0_6] : memref<176x128xf32, #tpu.memory_space<vmem>>, vector<1x128xf32>
    %c168 = arith.constant 168 : index
    %c0_7 = arith.constant 0 : index
    %6 = vector.load %arg2[%c168, %c0_7] : memref<176x128xf32, #tpu.memory_space<vmem>>, vector<1x1xf32>
    %cst = arith.constant dense<0.000000e+00> : vector<64x128xf32>
    %7 = tpu.matmul %0, %1, %cst {dimension_numbers = #tpu.dot_dimension_numbers<[1], [0], [0], [1], [0, 0, 1, 1], [], []>} : vector<64x16xf32>, vector<16x128xf32>, vector<64x128xf32> -> vector<64x128xf32>
    %8 = vector.broadcast %2 : vector<1x128xf32> to vector<64x128xf32>
    %9 = arith.addf %7, %8 : vector<64x128xf32>
    %10 = math.tanh %9 : vector<64x128xf32>
    %cst_8 = arith.constant dense<0.000000e+00> : vector<64x128xf32>
    %11 = tpu.matmul %10, %3, %cst_8 {dimension_numbers = #tpu.dot_dimension_numbers<[1], [0], [0], [1], [0, 0, 1, 1], [], []>} : vector<64x128xf32>, vector<128x128xf32>, vector<64x128xf32> -> vector<64x128xf32>
    %12 = vector.broadcast %4 : vector<1x128xf32> to vector<64x128xf32>
    %13 = arith.addf %11, %12 : vector<64x128xf32>
    %14 = math.tanh %13 : vector<64x128xf32>
    %cst_9 = arith.constant dense<0.000000e+00> : vector<1x64xf32>
    %15 = tpu.matmul %5, %14, %cst_9 {dimension_numbers = #tpu.dot_dimension_numbers<[1], [1], [0], [0], [0, 0, 1, 0], [], []>} : vector<1x128xf32>, vector<64x128xf32>, vector<1x64xf32> -> vector<1x64xf32>
    %16 = vector.broadcast %6 : vector<1x1xf32> to vector<1x64xf32>
    %17 = arith.addf %15, %16 : vector<1x64xf32>
    %c0_10 = arith.constant 0 : index
    %c0_11 = arith.constant 0 : index
    %18 = vector.load %arg3[%c0_10, %c0_11] : memref<1x64xf32, #tpu.memory_space<vmem>>, vector<1x64xf32>
    tpu.vector_store %arg3[%c0_10, %c0_11], %17 {strides = array<i32>} : memref<1x64xf32, #tpu.memory_space<vmem>>, vector<1x64xf32>,
    return
  }
  func.func @transform_0(%arg0: i32) -> (i32, i32) {
    %c0_i32 = arith.constant 0 : i32
    %c0_i32_0 = arith.constant 0 : i32
    return %arg0, %c0_i32 : i32, i32
  }
  func.func @transform_1(%arg0: i32) -> (i32, i32) {
    %c0_i32 = arith.constant 0 : i32
    %c0_i32_0 = arith.constant 0 : i32
    %c0_i32_1 = arith.constant 0 : i32
    return %c0_i32, %c0_i32_0 : i32, i32
  }
  func.func @transform_2(%arg0: i32) -> (i32, i32) {
    %c0_i32 = arith.constant 0 : i32
    %c0_i32_0 = arith.constant 0 : i32
    return %c0_i32, %arg0 : i32, i32
  }
}

</mosaic_0001>

<llo_original>
// kernel: critic_forward.1
$region0: #{critic_forward.1}
  #allocation0 [shape = 'u32[]', space=smem, size = 0x4, offset = 0x4, fixed_abs, tag = 'smem constant byte address 0x4 - core index']
  #allocation1 [shape = 'u32[72,128]{1,0:T(1,128)}', space=vmem, size = 0x9000, scoped, tag = 'internal scratch']
  %s0 = inlined_call_operand.vmem [shape: f32[64,16], index: 0, kind: input, shape index: {}]
  %s1 = inlined_call_operand.vmem [shape: f32[176,128], index: 1, kind: input, shape index: {}]
  %s2 = inlined_call_operand.hbm [shape: f32[1,64], index: 2, kind: output, shape index: {}]
  %s3 = sld [smem:[#allocation0]]
  $region18: #{critic_forward.1} parent=0
    _
  %s5 = ssub.s32 1, %s3
  %s6 = scalar_select 0, %s5, %s3
  $region1: #{critic_forward.1} parent=0
    #allocation2 [shape = 'u8[512]{0}', space=vmem, size = 0x400, scoped, tag = 'output window, operand 0, single buffered']
    #allocation3 [shape = 's32[1]{0}', space=sflag, size = 0x4, scoped, tag = 'scoped memory for critic_forward.1']
    %7 = vsyncpa [#allocation3], 0
    // Predicated region
    $region2: #{critic_forward.1} parent=1 // pred_check
      _
    $region3: #{critic_forward.1} parent=1 // pred_check_branch
      %9 = sbr.rel (0) target = $region5
    $region4: #{critic_forward.1} parent=1 // pred_region
      _
    $region5: #{critic_forward.1} parent=1 // pred_fallthru
      _
    // Predicated region
    $region6: #{critic_forward.1} parent=1 // pred_check
      _
    $region7: #{critic_forward.1} parent=1 // pred_check_branch
      %11 = sbr.rel (0) target = $region9
    $region8: #{critic_forward.1} parent=1 // pred_region
      _
    $region9: #{critic_forward.1} parent=1 // pred_fallthru
      _
    %v12 = vld [vmem:[%s0] sm:$0xff]
    %v13 = vld [vmem:[%s0 + $0x8] sm:$0xff]
    %v14 = vld [vmem:[%s0 + $0x10] sm:$0xff]
    %v15 = vld [vmem:[%s0 + $0x18] sm:$0xff]
    %v16 = vld [vmem:[%s0 + $0x20] sm:$0xff]
    %v17 = vld [vmem:[%s0 + $0x28] sm:$0xff]
    %v18 = vld [vmem:[%s0 + $0x30] sm:$0xff]
    %v19 = vld [vmem:[%s0 + $0x38] sm:$0xff]
    %v20 = vld [vmem:[%s1] sm:$0xff]
    %v21 = vld [vmem:[%s1 + $0x8] sm:$0xff]
    %v22 = vld [vmem:[%s1 + $0x10] sm:$0x1]
    %v23 = vld [vmem:[%s1 + $0x18] sm:$0xff]
    %v24 = vld [vmem:[%s1 + $0x20] sm:$0xff]
    %v25 = vld [vmem:[%s1 + $0x28] sm:$0xff]
    %v26 = vld [vmem:[%s1 + $0x30] sm:$0xff]
    %v27 = vld [vmem:[%s1 + $0x38] sm:$0xff]
    %v28 = vld [vmem:[%s1 + $0x40] sm:$0xff]
    %v29 = vld [vmem:[%s1 + $0x48] sm:$0xff]
    %v30 = vld [vmem:[%s1 + $0x50] sm:$0xff]
    %v31 = vld [vmem:[%s1 + $0x58] sm:$0xff]
    %v32 = vld [vmem:[%s1 + $0x60] sm:$0xff]
    %v33 = vld [vmem:[%s1 + $0x68] sm:$0xff]
    %v34 = vld [vmem:[%s1 + $0x70] sm:$0xff]
    %v35 = vld [vmem:[%s1 + $0x78] sm:$0xff]
    %v36 = vld [vmem:[%s1 + $0x80] sm:$0xff]
    %v37 = vld [vmem:[%s1 + $0x88] sm:$0xff]
    %v38 = vld [vmem:[%s1 + $0x90] sm:$0xff]
    %v39 = vld [vmem:[%s1 + $0x98] sm:$0x1]
    %v40 = vld [vmem:[%s1 + $0xa0] sm:$0x1]
    %v41 = vld [vmem:[%s1 + $0xa8] sm:$0x1]
    %v42 = vperm.slane %v22, 0
    %vm43 = vcmask 130048
    %v45 = vsel %vm43, %v12, 0
    %v48 = vsel %vm43, %v13, 0
    %v51 = vsel %vm43, %v14, 0
    %v54 = vsel %vm43, %v15, 0
    %v57 = vsel %vm43, %v16, 0
    %v60 = vsel %vm43, %v17, 0
    %v63 = vsel %vm43, %v18, 0
    %v66 = vsel %vm43, %v19, 0
    %68 = vmatpush.msra.mxu0 0.0
    %69 = vmatpush.msra.mxu0 0.0
    %70 = vmatpush.msra.mxu0 0.0
    %71 = vmatpush.msra.mxu0 0.0
    %72 = vmatpush.msra.mxu0 0.0
    %73 = vmatpush.msra.mxu0 0.0
    %74 = vmatpush.msra.mxu0 0.0
    %75 = vmatpush.msra.mxu0 0.0
    %76 = vmatpush.msra.mxu0 0.0
    %77 = vmatpush.msra.mxu0 0.0
    %78 = vmatpush.msra.mxu0 0.0
    %79 = vmatpush.msra.mxu0 0.0
    %80 = vmatpush.msra.mxu0 0.0
    %81 = vmatpush.msra.mxu0 0.0
    %82 = vmatpush.msra.mxu0 %v21
    %83 = vmatpush.msra.mxu0 %v20
    %84 = vmatmul.f32.gmra.mxu0 %v45
    %v85 = vpop.f32.mrf.mxu0
    %v86 = vadd.f32 %v42, %v85
    %87 = vmatmul.f32.gmra.mxu0 %v48
    %v88 = vpop.f32.mrf.mxu0
    %v89 = vadd.f32 %v42, %v88
    %90 = vmatmul.f32.gmra.mxu0 %v51
    %v91 = vpop.f32.mrf.mxu0
    %v92 = vadd.f32 %v42, %v91
    %93 = vmatmul.f32.gmra.mxu0 %v54
    %v94 = vpop.f32.mrf.mxu0
    %v95 = vadd.f32 %v42, %v94
    %96 = vmatmul.f32.gmra.mxu0 %v57
    %v97 = vpop.f32.mrf.mxu0
    %v98 = vadd.f32 %v42, %v97
    %99 = vmatmul.f32.gmra.mxu0 %v60
    %v100 = vpop.f32.mrf.mxu0
    %v101 = vadd.f32 %v42, %v100
    %102 = vmatmul.f32.gmra.mxu0 %v63
    %v103 = vpop.f32.mrf.mxu0
    %v104 = vadd.f32 %v42, %v103
    %105 = vmatmul.f32.gmra.mxu0 %v66
    %v106 = vpop.f32.mrf.mxu0
    %v107 = vadd.f32 %v42, %v106
    %108 = vdwg.mxu0
    %v109 = vtanh.pop %v86
    %v110 = vtanh.pop %v89
    %v111 = vtanh.pop %v92
    %v112 = vtanh.pop %v95
    %v113 = vtanh.pop %v98
    %v114 = vtanh.pop %v101
    %v115 = vtanh.pop %v104
    %v116 = vtanh.pop %v107
    %v117 = vperm.slane %v39, 0
    %118 = vmatpush.msra.mxu0 %v38
    %119 = vmatpush.msra.mxu0 %v37
    %120 = vmatpush.msra.mxu0 %v36
    %121 = vmatpush.msra.mxu0 %v35
    %122 = vmatpush.msra.mxu0 %v34
    %123 = vmatpush.msra.mxu0 %v33
    %124 = vmatpush.msra.mxu0 %v32
    %125 = vmatpush.msra.mxu0 %v31
    %126 = vmatpush.msra.mxu0 %v30
    %127 = vmatpush.msra.mxu0 %v29
    %128 = vmatpush.msra.mxu0 %v28
    %129 = vmatpush.msra.mxu0 %v27
    %130 = vmatpush.msra.mxu0 %v26
    %131 = vmatpush.msra.mxu0 %v25
    %132 = vmatpush.msra.mxu0 %v24
    %133 = vmatpush.msra.mxu0 %v23
    %134 = vmatmul.f32.gmra.mxu0 %v109
    %v135 = vpop.f32.mrf.mxu0
    %v136 = vadd.f32 %v117, %v135
    %137 = vmatmul.f32.gmra.mxu0 %v110
    %v138 = vpop.f32.mrf.mxu0
    %v139 = vadd.f32 %v117, %v138
    %140 = vmatmul.f32.gmra.mxu0 %v111
    %v141 = vpop.f32.mrf.mxu0
    %v142 = vadd.f32 %v117, %v141
    %143 = vmatmul.f32.gmra.mxu0 %v112
    %v144 = vpop.f32.mrf.mxu0
    %v145 = vadd.f32 %v117, %v144
    %146 = vmatmul.f32.gmra.mxu0 %v113
    %v147 = vpop.f32.mrf.mxu0
    %v148 = vadd.f32 %v117, %v147
    %149 = vmatmul.f32.gmra.mxu0 %v114
    %v150 = vpop.f32.mrf.mxu0
    %v151 = vadd.f32 %v117, %v150
    %152 = vmatmul.f32.gmra.mxu0 %v115
    %v153 = vpop.f32.mrf.mxu0
    %v154 = vadd.f32 %v117, %v153
    %155 = vmatmul.f32.gmra.mxu0 %v116
    %v156 = vpop.f32.mrf.mxu0
    %v157 = vadd.f32 %v117, %v156
    %158 = vdwg.mxu0
    %v159 = vtanh.pop %v136
    %v160 = vtanh.pop %v139
    %v161 = vtanh.pop %v142
    %v162 = vtanh.pop %v145
    %v163 = vtanh.pop %v148
    %v164 = vtanh.pop %v151
    %v165 = vtanh.pop %v154
    %v166 = vtanh.pop %v157
    %168 = vset.pattern.permute.xlu0 0
    %169 = vperm.xlu0 %168, %v41
    %v170 = vpop.permute.xlu0 %169
    %172 = vmatpush.xpose.msra.mxu0 0.0
    %173 = vmatpush.xpose.msra.mxu0 0.0
    %174 = vmatpush.xpose.msra.mxu0 0.0
    %175 = vmatpush.xpose.msra.mxu0 0.0
    %176 = vmatpush.xpose.msra.mxu0 0.0
    %177 = vmatpush.xpose.msra.mxu0 0.0
    %178 = vmatpush.xpose.msra.mxu0 0.0
    %179 = vmatpush.xpose.msra.mxu0 0.0
    %180 = vmatpush.xpose.msra.mxu0 %v166
    %181 = vmatpush.xpose.msra.mxu0 %v165
    %182 = vmatpush.xpose.msra.mxu0 %v164
    %183 = vmatpush.xpose.msra.mxu0 %v163
    %184 = vmatpush.xpose.msra.mxu0 %v162
    %185 = vmatpush.xpose.msra.mxu0 %v161
    %186 = vmatpush.xpose.msra.mxu0 %v160
    %187 = vmatpush.xpose.msra.mxu0 %v159
    %188 = vmatmul.f32.gmra.mxu0 %v40
    %v189 = vpop.f32.mrf.mxu0
    %v190 = vadd.f32 %v170, %v189
    %191 = vdwg.mxu0
    %vm192 = vcmask 516096
    %193 = vst.msk [vmem:[#allocation2] sm:$0x1] %vm192, %v190
    // Predicated region
    $region10: #{critic_forward.1} parent=1 // pred_check
      _
    $region11: #{critic_forward.1} parent=1 // pred_check_branch
      %195 = sbr.rel (0) target = $region13
    $region12: #{critic_forward.1} parent=1 // pred_region
      %197 = vsyncadd [#allocation3], 0
      %s199 = sshll.u32 [#allocation2], 4
      %s200 = int_to_ptr.vmem [resolvable:$true] %s199
      %s201 = sshll.u32 %s2, 4
      %s202 = int_to_ptr.hbm [resolvable:$true] %s201
      %204 = dma.vmem_to_hbm [thread:$0]  %s200, 16, %s202, [#allocation3]
    $region13: #{critic_forward.1} parent=1 // pred_fallthru
      _
    // Predicated region
    $region14: #{critic_forward.1} parent=1 // pred_check
      _
    $region15: #{critic_forward.1} parent=1 // pred_check_branch
      %206 = sbr.rel (0) target = $region17
    $region16: #{critic_forward.1} parent=1 // pred_region
      %208 = dma.done [#allocation3], 16
    $region17: #{critic_forward.1} parent=1 // pred_fallthru
      _
    %209 = vsyncpa [#allocation3], 1

</llo_original>
